<compile_context>
chip_gen: v6e
topology: v6e:2x2x1
jax: 0.10.0
libtpu: 0.0.40
codegen_flags: <defaults>
</compile_context>

<pallas_src>
import jax
import jax.numpy as jnp
from jax.experimental import pallas as pl
from jax.experimental.pallas import tpu as pltpu


# ----------------------------- kernel -----------------------------------

def decoder_kernel(z_ref,
                   w1_ref, b1_ref,
                   w2_ref, b2_ref,
                   w3_ref, b3_ref,
                   wh_ref, bh_ref,
                   out_ref):
    """Fused MLP: layer1 via VPU FMAs (tiny K), 2x MXU matmul+ReLU, fused (mu|logvar) head."""
    cdt = w2_ref.dtype            # compute dtype fed to the MXU (f32 default, bf16 opt-in)
    z_dim = z_ref.shape[1]

    # ---- layer 1: (tile, z_dim) @ (z_dim, Hp) ----
    if z_dim <= 8:
        # K is tiny: broadcast FMAs on the VPU, skip the MXU push/pop round-trip.
        z = z_ref[...].astype(jnp.float32)
        h = jnp.zeros((z.shape[0], w1_ref.shape[1]), jnp.float32)
        for k in range(z_dim):                       # static unroll, z_dim known at trace time
            h = h + z[:, k:k + 1] * w1_ref[k:k + 1, :].astype(jnp.float32)
        h = h + b1_ref[...]
    else:
        h = jnp.dot(z_ref[...].astype(cdt), w1_ref[...],
                    preferred_element_type=jnp.float32) + b1_ref[...]
    h = jnp.maximum(h, 0.0).astype(cdt)

    # ---- layer 2 ----
    h = jnp.dot(h, w2_ref[...], preferred_element_type=jnp.float32) + b2_ref[...]
    h = jnp.maximum(h, 0.0).astype(cdt)

    # ---- layer 3 ----
    h = jnp.dot(h, w3_ref[...], preferred_element_type=jnp.float32) + b3_ref[...]
    h = jnp.maximum(h, 0.0).astype(cdt)

    # ---- fused (mu | logvar) head, lane-dense 128-wide store ----
    out = jnp.dot(h, wh_ref[...], preferred_element_type=jnp.float32) + bh_ref[...]
    out_ref[...] = out.astype(out_ref.dtype)


# ----------------------------- parameter packing (call ONCE) -------------

def pack_decoder_params(params, *, compute_dtype=jnp.float32):
    """One-time packing: fuse heads, pad hidden/head dims to 128 lanes, cast dtypes.

    Numerically identical to the original parameters: padded weight rows/cols and bias
    entries are zero, ReLU(0) = 0, zero rows contribute nothing to a matmul, and the
    padded head columns are sliced off in the wrapper.
    """
    z_dim, hidden = params["w1"].shape
    x_dim = params["w_mu"].shape[1]
    Hp = pl.cdiv(hidden, 128) * 128
    head_cols = 2 * x_dim
    Cp = pl.cdiv(head_cols, 128) * 128

    def padw(w, rows, cols):
        return jnp.pad(w, ((0, rows - w.shape[0]), (0, cols - w.shape[1])))

    w_head = jnp.concatenate([params["w_mu"], params["w_lv"]], axis=1)
    b_head = jnp.concatenate([params["b_mu"], params["b_lv"]], axis=1)

    return {
        "w1": padw(params["w1"], z_dim, Hp).astype(compute_dtype),
        "b1": padw(params["b1"], 1, Hp).astype(jnp.float32),
        "w2": padw(params["w2"], Hp, Hp).astype(compute_dtype),
        "b2": padw(params["b2"], 1, Hp).astype(jnp.float32),
        "w3": padw(params["w3"], Hp, Hp).astype(compute_dtype),
        "b3": padw(params["b3"], 1, Hp).astype(jnp.float32),
        "w_head": padw(w_head, Hp, Cp).astype(compute_dtype),
        "b_head": padw(b_head, 1, Cp).astype(jnp.float32),
    }


# ----------------------------- wrapper -----------------------------------

def _row_map(i):
    return (i, 0)


def _rep_map(i):
    return (0, 0)


def _weight_spec(shape, multi_step):
    # Grid-invariant operand: with >1 grid step a single VMEM buffer is enough.
    if multi_step and hasattr(pl, "Buffered"):
        return pl.BlockSpec(shape, _rep_map, pipeline_mode=pl.Buffered(1))
    return pl.BlockSpec(shape, _rep_map)


def _choose_batch_tile(B, *, sublane, row_bytes, min_steps=1,
                       vmem_budget=8 * 1024 * 1024):
    """Largest batch tile that fits the VMEM budget.

    min_steps=1 -> grid=1 whenever the whole batch fits (v5e/v6e: single TensorCore,
    every extra grid step is ~0.35 us of pure overhead).  Pass min_steps=2 on v7x so
    the 'parallel' batch axis can shard across its 2 TensorCores.
    """
    max_rows = max(sublane, vmem_budget // max(row_bytes, 1))
    if min_steps <= 1 and B <= max_rows:
        return B                            # grid = 1: whole batch in one block
    limit = min(B // max(min_steps, 1), max_rows)
    for cand in range(limit, sublane - 1, -1):
        if B % cand == 0 and cand % sublane == 0:
            return cand
    return B                                # fallback: single full-array block


def decoder_forward(z, packed, x_dim, *, batch_tile=None, min_grid_steps=1,
                    vmem_limit_bytes=None):
    """Decoder forward pass as a single Pallas TPU kernel.

    packed: output of `pack_decoder_params` (arrays only; call it once, outside the
            hot path).
    min_grid_steps: 1 for v5e/v6e (single TC), 2 for v7x (two TCs share the batch).
    """
    B, z_dim = z.shape
    compute_dtype = packed["w2"].dtype
    Hp = packed["w2"].shape[0]
    Cp = packed["w_head"].shape[1]
    out_itemsize = jnp.dtype(compute_dtype).itemsize

    # --- batch tiling: biggest tile that fits VMEM; grid=1 for small problems ---
    sublane = 16 if compute_dtype == jnp.bfloat16 else 8
    row_bytes = z_dim * z.dtype.itemsize + Cp * out_itemsize + 3 * Hp * 4
    if batch_tile is None:
        batch_tile = _choose_batch_tile(B, sublane=sublane, row_bytes=row_bytes,
                                        min_steps=min_grid_steps)
    assert B % batch_tile == 0, "batch must be divisible by batch_tile"
    if batch_tile != B:
        assert batch_tile % 8 == 0, \
            "batch_tile must be a multiple of 8 (sublane) when smaller than B"
    grid = (B // batch_tile,)
    multi_step = grid[0] > 1

    weight_args = (packed["w1"], packed["b1"], packed["w2"], packed["b2"],
                   packed["w3"], packed["b3"], packed["w_head"], packed["b_head"])

    in_specs = [pl.BlockSpec((batch_tile, z_dim), _row_map)]
    in_specs += [_weight_spec(arr.shape, multi_step) for arr in weight_args]

    fn = pl.pallas_call(
        decoder_kernel,
        out_shape=jax.ShapeDtypeStruct((B, Cp), compute_dtype),
        grid_spec=pltpu.PrefetchScalarGridSpec(
            num_scalar_prefetch=0,
            grid=grid,
            in_specs=in_specs,
            out_specs=pl.BlockSpec((batch_tile, Cp), _row_map),
        ),
        compiler_params=pltpu.CompilerParams(
            dimension_semantics=("parallel",),   # batch axis -> v7x dual-TC when grid>1
            vmem_limit_bytes=vmem_limit_bytes,
        ),
    )
    packed_out = fn(z, *weight_args)

    mu = packed_out[:, :x_dim].astype(z.dtype)
    lv = packed_out[:, x_dim:2 * x_dim].astype(z.dtype)
    return mu, lv


# ----------------------------- init & reference --------------------------

def init_decoder_params(key, z_dim=2, x_dim=2, hidden_dim=32, dtype=jnp.float32):
    """PyTorch nn.Linear-style init (U[-1/sqrt(fan_in), +1/sqrt(fan_in)]).

    Weights stored as (in_features, out_features) == PyTorch weight.T.
    """
    dims = [
        ("w1", "b1", z_dim, hidden_dim),
        ("w2", "b2", hidden_dim, hidden_dim),
        ("w3", "b3", hidden_dim, hidden_dim),
        ("w_mu", "b_mu", hidden_dim, x_dim),
        ("w_lv", "b_lv", hidden_dim, x_dim),
    ]
    params = {}
    keys = jax.random.split(key, 2 * len(dims))
    for idx, (wname, bname, fan_in, fan_out) in enumerate(dims):
        bound = 1.0 / jnp.sqrt(jnp.asarray(fan_in, dtype=jnp.float32))
        params[wname] = jax.random.uniform(
            keys[2 * idx], (fan_in, fan_out), dtype=dtype, minval=-bound, maxval=bound)
        params[bname] = jax.random.uniform(
            keys[2 * idx + 1], (1, fan_out), dtype=dtype, minval=-bound, maxval=bound)
    return params


def decoder_reference(z, params):
    """Pure-JAX f32 reference (matches the PyTorch forward)."""
    h = jnp.maximum(z @ params["w1"] + params["b1"], 0.0)
    h = jnp.maximum(h @ params["w2"] + params["b2"], 0.0)
    h = jnp.maximum(h @ params["w3"] + params["b3"], 0.0)
    mu = h @ params["w_mu"] + params["b_mu"]
    lv = h @ params["w_lv"] + params["b_lv"]
    return mu, lv


# ----------------------------- demo / test -------------------------------

if __name__ == "__main__":
    key = jax.random.PRNGKey(0)
    k_param, k_z = jax.random.split(key)

    z_dim, x_dim, hidden_dim = 2, 2, 32
    batch = 64

    params = init_decoder_params(k_param, z_dim=z_dim, x_dim=x_dim, hidden_dim=hidden_dim)
    z = jax.random.normal(k_z, (batch, z_dim), dtype=jnp.float32)

    mu_ref, lv_ref = decoder_reference(z, params)

    # Default f32 path: exact PyTorch-forward semantics; params packed ONCE outside jit.
    packed_f32 = pack_decoder_params(params)                 # compute_dtype=f32 default
    fwd_f32 = jax.jit(lambda zz: decoder_forward(zz, packed_f32, x_dim))
    mu32, lv32 = fwd_f32(z)
    jax.block_until_ready((mu32, lv32))
    assert mu32.shape == (batch, x_dim) and lv32.shape == (batch, x_dim)
    assert jnp.allclose(mu32, mu_ref, atol=1e-5, rtol=1e-5)
    assert jnp.allclose(lv32, lv_ref, atol=1e-5, rtol=1e-5)

    # Opt-in bf16 path: bf16 MXU operands, f32 accumulate / bias / ReLU.
    packed_bf16 = pack_decoder_params(params, compute_dtype=jnp.bfloat16)
    fwd_bf16 = jax.jit(lambda zz: decoder_forward(zz, packed_bf16, x_dim))
    mu16, lv16 = fwd_bf16(z)
    jax.block_until_ready((mu16, lv16))
    assert mu16.shape == (batch, x_dim) and lv16.shape == (batch, x_dim)
    assert jnp.allclose(mu16, mu_ref, atol=5e-2, rtol=5e-2)
    assert jnp.allclose(lv16, lv_ref, atol=5e-2, rtol=5e-2)

    print("KERNEL_OK")
</pallas_src>

<mosaic_0001>
module attributes {stable_mosaic.version = 11 : i64} {
  func.func @decoder_kernel(%arg0: i32, %arg1: memref<64x2xf32, #tpu.memory_space<vmem>>, %arg2: memref<2x128xf32, #tpu.memory_space<vmem>>, %arg3: memref<1x128xf32, #tpu.memory_space<vmem>>, %arg4: memref<128x128xf32, #tpu.memory_space<vmem>>, %arg5: memref<1x128xf32, #tpu.memory_space<vmem>>, %arg6: memref<128x128xf32, #tpu.memory_space<vmem>>, %arg7: memref<1x128xf32, #tpu.memory_space<vmem>>, %arg8: memref<128x128xf32, #tpu.memory_space<vmem>>, %arg9: memref<1x128xf32, #tpu.memory_space<vmem>>, %arg10: memref<64x128xf32, #tpu.memory_space<vmem>>) attributes {dimension_semantics = [#tpu.dimension_semantics<parallel>], iteration_bounds = array<i64: 1>, scalar_prefetch = 0 : i64, scratch_operands = 0 : i64, tpu.core_type = #tpu.core_type<tc>, window_params = [{transform_indices = @transform_0, window_bounds = array<i64: 64, 2>}, {pipeline_mode = #tpu.pipeline_mode<synchronous>, transform_indices = @transform_1, window_bounds = array<i64: 2, 128>}, {pipeline_mode = #tpu.pipeline_mode<synchronous>, transform_indices = @transform_2, window_bounds = array<i64: 1, 128>}, {pipeline_mode = #tpu.pipeline_mode<synchronous>, transform_indices = @transform_3, window_bounds = array<i64: 128, 128>}, {pipeline_mode = #tpu.pipeline_mode<synchronous>, transform_indices = @transform_4, window_bounds = array<i64: 1, 128>}, {pipeline_mode = #tpu.pipeline_mode<synchronous>, transform_indices = @transform_5, window_bounds = array<i64: 128, 128>}, {pipeline_mode = #tpu.pipeline_mode<synchronous>, transform_indices = @transform_6, window_bounds = array<i64: 1, 128>}, {pipeline_mode = #tpu.pipeline_mode<synchronous>, transform_indices = @transform_7, window_bounds = array<i64: 128, 128>}, {pipeline_mode = #tpu.pipeline_mode<synchronous>, transform_indices = @transform_8, window_bounds = array<i64: 1, 128>}, {transform_indices = @transform_9, window_bounds = array<i64: 64, 128>}]} {
    %c0 = arith.constant 0 : index
    %c0_0 = arith.constant 0 : index
    %0 = vector.load %arg1[%c0, %c0_0] : memref<64x2xf32, #tpu.memory_space<vmem>>, vector<64x2xf32>
    %cst = arith.constant 0.000000e+00 : f32
    %1 = vector.broadcast %cst : f32 to vector<64x128xf32>
    %2 = vector.extract_strided_slice %0 {offsets = [0, 0], sizes = [64, 1], strides = [1, 1]} : vector<64x2xf32> to vector<64x1xf32>
    %c0_1 = arith.constant 0 : index
    %c0_2 = arith.constant 0 : index
    %3 = vector.load %arg2[%c0_1, %c0_2] : memref<2x128xf32, #tpu.memory_space<vmem>>, vector<1x128xf32>
    %4 = vector.broadcast %2 : vector<64x1xf32> to vector<64x128xf32>
    %5 = vector.broadcast %3 : vector<1x128xf32> to vector<64x128xf32>
    %6 = arith.mulf %4, %5 : vector<64x128xf32>
    %7 = arith.addf %1, %6 : vector<64x128xf32>
    %8 = vector.extract_strided_slice %0 {offsets = [0, 1], sizes = [64, 1], strides = [1, 1]} : vector<64x2xf32> to vector<64x1xf32>
    %c1 = arith.constant 1 : index
    %c0_3 = arith.constant 0 : index
    %9 = vector.load %arg2[%c1, %c0_3] : memref<2x128xf32, #tpu.memory_space<vmem>>, vector<1x128xf32>
    %10 = vector.broadcast %8 : vector<64x1xf32> to vector<64x128xf32>
    %11 = vector.broadcast %9 : vector<1x128xf32> to vector<64x128xf32>
    %12 = arith.mulf %10, %11 : vector<64x128xf32>
    %13 = arith.addf %7, %12 : vector<64x128xf32>
    %c0_4 = arith.constant 0 : index
    %c0_5 = arith.constant 0 : index
    %14 = vector.load %arg3[%c0_4, %c0_5] : memref<1x128xf32, #tpu.memory_space<vmem>>, vector<1x128xf32>
    %15 = vector.broadcast %14 : vector<1x128xf32> to vector<64x128xf32>
    %16 = arith.addf %13, %15 : vector<64x128xf32>
    %cst_6 = arith.constant 0.000000e+00 : f32
    %17 = vector.broadcast %cst_6 : f32 to vector<64x128xf32>
    %18 = arith.maximumf %16, %17 : vector<64x128xf32>
    %c0_7 = arith.constant 0 : index
    %c0_8 = arith.constant 0 : index
    %19 = vector.load %arg4[%c0_7, %c0_8] : memref<128x128xf32, #tpu.memory_space<vmem>>, vector<128x128xf32>
    %cst_9 = arith.constant dense<0.000000e+00> : vector<64x128xf32>
    %20 = tpu.matmul %18, %19, %cst_9 {dimension_numbers = #tpu.dot_dimension_numbers<[1], [0], [0], [1], [0, 0, 1, 1], [], []>} : vector<64x128xf32>, vector<128x128xf32>, vector<64x128xf32> -> vector<64x128xf32>
    %c0_10 = arith.constant 0 : index
    %c0_11 = arith.constant 0 : index
    %21 = vector.load %arg5[%c0_10, %c0_11] : memref<1x128xf32, #tpu.memory_space<vmem>>, vector<1x128xf32>
    %22 = vector.broadcast %21 : vector<1x128xf32> to vector<64x128xf32>
    %23 = arith.addf %20, %22 : vector<64x128xf32>
    %cst_12 = arith.constant 0.000000e+00 : f32
    %24 = vector.broadcast %cst_12 : f32 to vector<64x128xf32>
    %25 = arith.maximumf %23, %24 : vector<64x128xf32>
    %c0_13 = arith.constant 0 : index
    %c0_14 = arith.constant 0 : index
    %26 = vector.load %arg6[%c0_13, %c0_14] : memref<128x128xf32, #tpu.memory_space<vmem>>, vector<128x128xf32>
    %cst_15 = arith.constant dense<0.000000e+00> : vector<64x128xf32>
    %27 = tpu.matmul %25, %26, %cst_15 {dimension_numbers = #tpu.dot_dimension_numbers<[1], [0], [0], [1], [0, 0, 1, 1], [], []>} : vector<64x128xf32>, vector<128x128xf32>, vector<64x128xf32> -> vector<64x128xf32>
    %c0_16 = arith.constant 0 : index
    %c0_17 = arith.constant 0 : index
    %28 = vector.load %arg7[%c0_16, %c0_17] : memref<1x128xf32, #tpu.memory_space<vmem>>, vector<1x128xf32>
    %29 = vector.broadcast %28 : vector<1x128xf32> to vector<64x128xf32>
    %30 = arith.addf %27, %29 : vector<64x128xf32>
    %cst_18 = arith.constant 0.000000e+00 : f32
    %31 = vector.broadcast %cst_18 : f32 to vector<64x128xf32>
    %32 = arith.maximumf %30, %31 : vector<64x128xf32>
    %c0_19 = arith.constant 0 : index
    %c0_20 = arith.constant 0 : index
    %33 = vector.load %arg8[%c0_19, %c0_20] : memref<128x128xf32, #tpu.memory_space<vmem>>, vector<128x128xf32>
    %cst_21 = arith.constant dense<0.000000e+00> : vector<64x128xf32>
    %34 = tpu.matmul %32, %33, %cst_21 {dimension_numbers = #tpu.dot_dimension_numbers<[1], [0], [0], [1], [0, 0, 1, 1], [], []>} : vector<64x128xf32>, vector<128x128xf32>, vector<64x128xf32> -> vector<64x128xf32>
    %c0_22 = arith.constant 0 : index
    %c0_23 = arith.constant 0 : index
    %35 = vector.load %arg9[%c0_22, %c0_23] : memref<1x128xf32, #tpu.memory_space<vmem>>, vector<1x128xf32>
    %36 = vector.broadcast %35 : vector<1x128xf32> to vector<64x128xf32>
    %37 = arith.addf %34, %36 : vector<64x128xf32>
    %c0_24 = arith.constant 0 : index
    %c0_25 = arith.constant 0 : index
    %38 = vector.load %arg10[%c0_24, %c0_25] : memref<64x128xf32, #tpu.memory_space<vmem>>, vector<64x128xf32>
    tpu.vector_store %arg10[%c0_24, %c0_25], %37 {strides = array<i32>} : memref<64x128xf32, #tpu.memory_space<vmem>>, vector<64x128xf32>,
    return
  }
  func.func @transform_0(%arg0: i32) -> (i32, i32) {
    %c0_i32 = arith.constant 0 : i32
    %c0_i32_0 = arith.constant 0 : i32
    return %arg0, %c0_i32 : i32, i32
  }
  func.func @transform_1(%arg0: i32) -> (i32, i32) {
    %c0_i32 = arith.constant 0 : i32
    %c0_i32_0 = arith.constant 0 : i32
    %c0_i32_1 = arith.constant 0 : i32
    return %c0_i32, %c0_i32_0 : i32, i32
  }
  func.func @transform_2(%arg0: i32) -> (i32, i32) {
    %c0_i32 = arith.constant 0 : i32
    %c0_i32_0 = arith.constant 0 : i32
    %c0_i32_1 = arith.constant 0 : i32
    return %c0_i32, %c0_i32_0 : i32, i32
  }
  func.func @transform_3(%arg0: i32) -> (i32, i32) {
    %c0_i32 = arith.constant 0 : i32
    %c0_i32_0 = arith.constant 0 : i32
    %c0_i32_1 = arith.constant 0 : i32
    return %c0_i32, %c0_i32_0 : i32, i32
  }
  func.func @transform_4(%arg0: i32) -> (i32, i32) {
    %c0_i32 = arith.constant 0 : i32
    %c0_i32_0 = arith.constant 0 : i32
    %c0_i32_1 = arith.constant 0 : i32
    return %c0_i32, %c0_i32_0 : i32, i32
  }
  func.func @transform_5(%arg0: i32) -> (i32, i32) {
    %c0_i32 = arith.constant 0 : i32
    %c0_i32_0 = arith.constant 0 : i32
    %c0_i32_1 = arith.constant 0 : i32
    return %c0_i32, %c0_i32_0 : i32, i32
  }
  func.func @transform_6(%arg0: i32) -> (i32, i32) {
    %c0_i32 = arith.constant 0 : i32
    %c0_i32_0 = arith.constant 0 : i32
    %c0_i32_1 = arith.constant 0 : i32
    return %c0_i32, %c0_i32_0 : i32, i32
  }
  func.func @transform_7(%arg0: i32) -> (i32, i32) {
    %c0_i32 = arith.constant 0 : i32
    %c0_i32_0 = arith.constant 0 : i32
    %c0_i32_1 = arith.constant 0 : i32
    return %c0_i32, %c0_i32_0 : i32, i32
  }
  func.func @transform_8(%arg0: i32) -> (i32, i32) {
    %c0_i32 = arith.constant 0 : i32
    %c0_i32_0 = arith.constant 0 : i32
    %c0_i32_1 = arith.constant 0 : i32
    return %c0_i32, %c0_i32_0 : i32, i32
  }
  func.func @transform_9(%arg0: i32) -> (i32, i32) {
    %c0_i32 = arith.constant 0 : i32
    %c0_i32_0 = arith.constant 0 : i32
    return %arg0, %c0_i32 : i32, i32
  }
}

</mosaic_0001>

<llo_original>
// kernel: _lambda_.1
$region0: #{_lambda_.1}
  #allocation0 [shape = 'u32[]', space=smem, size = 0x4, offset = 0x4, fixed_abs, tag = 'smem constant byte address 0x4 - core index']
  #allocation1 [shape = 'u32[144,128]{1,0:T(1,128)}', space=vmem, size = 0x12000, scoped, tag = 'internal scratch']
  %s0 = inlined_call_operand.vmem [shape: f32[64,2], index: 0, kind: input, shape index: {}]
  %s1 = inlined_call_operand.vmem [shape: f32[2,128], index: 1, kind: input, shape index: {}]
  %s2 = inlined_call_operand.vmem [shape: f32[1,128], index: 2, kind: input, shape index: {}]
  %s3 = inlined_call_operand.hbm [shape: f32[128,128], index: 3, kind: input, shape index: {}]
  %s4 = inlined_call_operand.vmem [shape: f32[1,128], index: 4, kind: input, shape index: {}]
  %s5 = inlined_call_operand.hbm [shape: f32[128,128], index: 5, kind: input, shape index: {}]
  %s6 = inlined_call_operand.vmem [shape: f32[1,128], index: 6, kind: input, shape index: {}]
  %s7 = inlined_call_operand.hbm [shape: f32[128,128], index: 7, kind: input, shape index: {}]
  %s8 = inlined_call_operand.vmem [shape: f32[1,128], index: 8, kind: input, shape index: {}]
  %s9 = inlined_call_operand.vmem [shape: f32[64,128], index: 9, kind: output, shape index: {}]
  %s10 = sld [smem:[#allocation0]]
  $region58: #{_lambda_.1} parent=0
    _
  %s12 = ssub.s32 1, %s10
  %s13 = scalar_select 0, %s12, %s10
  $region1: #{_lambda_.1} parent=0
    #allocation2 [shape = 'u8[65536]{0}', space=vmem, size = 0x10000, scoped, tag = 'input window, operand 3, single buffered']
    #allocation3 [shape = 's32[1]{0}', space=sflag, size = 0x4, scoped, tag = 'scoped memory for _lambda_.1']
    #allocation4 [shape = 'u8[65536]{0}', space=vmem, size = 0x10000, scoped, tag = 'input window, operand 5, single buffered']
    #allocation5 [shape = 's32[1]{0}', space=sflag, size = 0x4, scoped, tag = 'scoped memory for _lambda_.1']
    #allocation6 [shape = 'u8[65536]{0}', space=vmem, size = 0x10000, scoped, tag = 'input window, operand 7, single buffered']
    %14 = vsyncpa [#allocation3], 0
    %15 = vsyncpa [#allocation5], 0
    // Predicated region
    $region2: #{_lambda_.1} parent=1 // pred_check
      _
    $region3: #{_lambda_.1} parent=1 // pred_check_branch
      %17 = sbr.rel (0) target = $region5
    $region4: #{_lambda_.1} parent=1 // pred_region
      _
    $region5: #{_lambda_.1} parent=1 // pred_fallthru
      _
    // Predicated region
    $region6: #{_lambda_.1} parent=1 // pred_check
      _
    $region7: #{_lambda_.1} parent=1 // pred_check_branch
      %19 = sbr.rel (0) target = $region9
    $region8: #{_lambda_.1} parent=1 // pred_region
      _
    $region9: #{_lambda_.1} parent=1 // pred_fallthru
      _
    // Predicated region
    $region10: #{_lambda_.1} parent=1 // pred_check
      _
    $region11: #{_lambda_.1} parent=1 // pred_check_branch
      %21 = sbr.rel (0) target = $region13
    $region12: #{_lambda_.1} parent=1 // pred_region
      _
    $region13: #{_lambda_.1} parent=1 // pred_fallthru
      _
    // Predicated region
    $region14: #{_lambda_.1} parent=1 // pred_check
      _
    $region15: #{_lambda_.1} parent=1 // pred_check_branch
      %23 = sbr.rel (0) target = $region17
    $region16: #{_lambda_.1} parent=1 // pred_region
      %s25 = ssub.s32 2048, 2048
      %26 = vsyncadd [#allocation3], %s25
      %s27 = sshll.u32 [#allocation2], 4
      %s28 = int_to_ptr.vmem [resolvable:$true] %s27
      %33 = dma.hbm_to_vmem [thread:$0]  %s3, 2048, %s28, [#allocation3], 128, 128, 8
    $region17: #{_lambda_.1} parent=1 // pred_fallthru
      _
    // Predicated region
    $region18: #{_lambda_.1} parent=1 // pred_check
      _
    $region19: #{_lambda_.1} parent=1 // pred_check_branch
      %35 = sbr.rel (0) target = $region21
    $region20: #{_lambda_.1} parent=1 // pred_region
      _
    $region21: #{_lambda_.1} parent=1 // pred_fallthru
      _
    // Predicated region
    $region22: #{_lambda_.1} parent=1 // pred_check
      _
    $region23: #{_lambda_.1} parent=1 // pred_check_branch
      %37 = sbr.rel (0) target = $region25
    $region24: #{_lambda_.1} parent=1 // pred_region
      %s39 = ssub.s32 2048, 2048
      %40 = vsyncadd [#allocation5], %s39
      %s41 = sshll.u32 [#allocation4], 4
      %s42 = int_to_ptr.vmem [resolvable:$true] %s41
      %47 = dma.hbm_to_vmem [thread:$0]  %s5, 2048, %s42, [#allocation5], 128, 128, 8
    $region25: #{_lambda_.1} parent=1 // pred_fallthru
      _
    // Predicated region
    $region26: #{_lambda_.1} parent=1 // pred_check
      _
    $region27: #{_lambda_.1} parent=1 // pred_check_branch
      %49 = sbr.rel (0) target = $region29
    $region28: #{_lambda_.1} parent=1 // pred_region
      _
    $region29: #{_lambda_.1} parent=1 // pred_fallthru
      _
    // Predicated region
    $region30: #{_lambda_.1} parent=1 // pred_check
      _
    $region31: #{_lambda_.1} parent=1 // pred_check_branch
      %51 = sbr.rel (0) target = $region33
    $region32: #{_lambda_.1} parent=1 // pred_region
      %s53 = ssub.s32 2048, 2048
      %54 = vsyncadd [#allocation5], %s53
      %s55 = sshll.u32 [#allocation6], 4
      %s56 = int_to_ptr.vmem [resolvable:$true] %s55
      %61 = dma.hbm_to_vmem [thread:$0]  %s7, 2048, %s56, [#allocation5], 128, 128, 8
    $region33: #{_lambda_.1} parent=1 // pred_fallthru
      _
    // Predicated region
    $region34: #{_lambda_.1} parent=1 // pred_check
      _
    $region35: #{_lambda_.1} parent=1 // pred_check_branch
      %63 = sbr.rel (0) target = $region37
    $region36: #{_lambda_.1} parent=1 // pred_region
      _
    $region37: #{_lambda_.1} parent=1 // pred_fallthru
      _
    // Predicated region
    $region38: #{_lambda_.1} parent=1 // pred_check
      _
    $region39: #{_lambda_.1} parent=1 // pred_check_branch
      %65 = sbr.rel (0) target = $region41
    $region40: #{_lambda_.1} parent=1 // pred_region
      %66 = dma.done [#allocation3], 2048
    $region41: #{_lambda_.1} parent=1 // pred_fallthru
      _
    // Predicated region
    $region42: #{_lambda_.1} parent=1 // pred_check
      _
    $region43: #{_lambda_.1} parent=1 // pred_check_branch
      %68 = sbr.rel (0) target = $region45
    $region44: #{_lambda_.1} parent=1 // pred_region
      %69 = dma.done [#allocation5], 2048
    $region45: #{_lambda_.1} parent=1 // pred_fallthru
      _
    // Predicated region
    $region46: #{_lambda_.1} parent=1 // pred_check
      _
    $region47: #{_lambda_.1} parent=1 // pred_check_branch
      %71 = sbr.rel (0) target = $region49
    $region48: #{_lambda_.1} parent=1 // pred_region
      %72 = dma.done [#allocation5], 2048
    $region49: #{_lambda_.1} parent=1 // pred_fallthru
      _
    %v73 = vld [vmem:[%s0] sm:$0xff]
    %v74 = vld [vmem:[%s0 + $0x8] sm:$0xff]
    %v75 = vld [vmem:[%s0 + $0x10] sm:$0xff]
    %v76 = vld [vmem:[%s0 + $0x18] sm:$0xff]
    %v77 = vld [vmem:[%s0 + $0x20] sm:$0xff]
    %v78 = vld [vmem:[%s0 + $0x28] sm:$0xff]
    %v79 = vld [vmem:[%s0 + $0x30] sm:$0xff]
    %v80 = vld [vmem:[%s0 + $0x38] sm:$0xff]
    %v81 = vld [vmem:[%s1] sm:$0x1]
    %83 = vset.pattern.permute.xlu0 0
    %84 = vperm.xlu0 %83, %v73
    %v85 = vpop.permute.xlu0 %84
    %88 = vset.pattern.permute.xlu0 0
    %89 = vperm.xlu0 %88, %v74
    %v90 = vpop.permute.xlu0 %89
    %93 = vset.pattern.permute.xlu0 0
    %94 = vperm.xlu0 %93, %v75
    %v95 = vpop.permute.xlu0 %94
    %98 = vset.pattern.permute.xlu0 0
    %99 = vperm.xlu0 %98, %v76
    %v100 = vpop.permute.xlu0 %99
    %103 = vset.pattern.permute.xlu0 0
    %104 = vperm.xlu0 %103, %v77
    %v105 = vpop.permute.xlu0 %104
    %108 = vset.pattern.permute.xlu0 0
    %109 = vperm.xlu0 %108, %v78
    %v110 = vpop.permute.xlu0 %109
    %113 = vset.pattern.permute.xlu0 0
    %114 = vperm.xlu0 %113, %v79
    %v115 = vpop.permute.xlu0 %114
    %118 = vset.pattern.permute.xlu0 0
    %119 = vperm.xlu0 %118, %v80
    %v120 = vpop.permute.xlu0 %119
    %v122 = vlaneseq
    %v123 = vshrl.u32 %v122, 7
    %v124 = vsub.s32 0, %v123
    %v125 = vrot.slane %v81, %v124
    %v126 = vmul.f32 %v85, %v125
    %v127 = vmul.f32 %v90, %v125
    %v128 = vmul.f32 %v95, %v125
    %v129 = vmul.f32 %v100, %v125
    %v130 = vmul.f32 %v105, %v125
    %v131 = vmul.f32 %v110, %v125
    %v132 = vmul.f32 %v115, %v125
    %v133 = vmul.f32 %v120, %v125
    %v134 = vadd.f32 %v126, 0.0
    %v135 = vadd.f32 %v127, 0.0
    %v136 = vadd.f32 %v128, 0.0
    %v137 = vadd.f32 %v129, 0.0
    %v138 = vadd.f32 %v130, 0.0
    %v139 = vadd.f32 %v131, 0.0
    %v140 = vadd.f32 %v132, 0.0
    %v141 = vadd.f32 %v133, 0.0
    %v142 = vld [vmem:[%s1 + $0x1] sm:$0x1]
    %143 = vset.pattern.permute.xlu0 1
    %144 = vperm.xlu0 %143, %v73
    %v145 = vpop.permute.xlu0 %144
    %147 = vset.pattern.permute.xlu0 1
    %148 = vperm.xlu0 %147, %v74
    %v149 = vpop.permute.xlu0 %148
    %151 = vset.pattern.permute.xlu0 1
    %152 = vperm.xlu0 %151, %v75
    %v153 = vpop.permute.xlu0 %152
    %155 = vset.pattern.permute.xlu0 1
    %156 = vperm.xlu0 %155, %v76
    %v157 = vpop.permute.xlu0 %156
    %159 = vset.pattern.permute.xlu0 1
    %160 = vperm.xlu0 %159, %v77
    %v161 = vpop.permute.xlu0 %160
    %163 = vset.pattern.permute.xlu0 1
    %164 = vperm.xlu0 %163, %v78
    %v165 = vpop.permute.xlu0 %164
    %167 = vset.pattern.permute.xlu0 1
    %168 = vperm.xlu0 %167, %v79
    %v169 = vpop.permute.xlu0 %168
    %171 = vset.pattern.permute.xlu0 1
    %172 = vperm.xlu0 %171, %v80
    %v173 = vpop.permute.xlu0 %172
    %v175 = vlaneseq
    %v176 = vshrl.u32 %v175, 7
    %v177 = vsub.s32 0, %v176
    %v178 = vrot.slane %v142, %v177
    %v179 = vmul.f32 %v145, %v178
    %v180 = vmul.f32 %v149, %v178
    %v181 = vmul.f32 %v153, %v178
    %v182 = vmul.f32 %v157, %v178
    %v183 = vmul.f32 %v161, %v178
    %v184 = vmul.f32 %v165, %v178
    %v185 = vmul.f32 %v169, %v178
    %v186 = vmul.f32 %v173, %v178
    %v187 = vadd.f32 %v134, %v179
    %v188 = vadd.f32 %v135, %v180
    %v189 = vadd.f32 %v136, %v181
    %v190 = vadd.f32 %v137, %v182
    %v191 = vadd.f32 %v138, %v183
    %v192 = vadd.f32 %v139, %v184
    %v193 = vadd.f32 %v140, %v185
    %v194 = vadd.f32 %v141, %v186
    %v195 = vld [vmem:[%s2] sm:$0x1]
    %v197 = vlaneseq
    %v198 = vshrl.u32 %v197, 7
    %v199 = vsub.s32 0, %v198
    %v200 = vrot.slane %v195, %v199
    %v202 = vadd.f32 %v187, %v200
    %v203 = vadd.f32 %v188, %v200
    %v204 = vadd.f32 %v189, %v200
    %v205 = vadd.f32 %v190, %v200
    %v206 = vadd.f32 %v191, %v200
    %v207 = vadd.f32 %v192, %v200
    %v208 = vadd.f32 %v193, %v200
    %v209 = vadd.f32 %v194, %v200
    %v210 = vmax.f32 %v202, 0.0
    %v211 = vmax.f32 %v203, 0.0
    %v212 = vmax.f32 %v204, 0.0
    %v213 = vmax.f32 %v205, 0.0
    %v214 = vmax.f32 %v206, 0.0
    %v215 = vmax.f32 %v207, 0.0
    %v216 = vmax.f32 %v208, 0.0
    %v217 = vmax.f32 %v209, 0.0
    %v218 = vld [vmem:[#allocation2] sm:$0xff]
    %v219 = vld [vmem:[#allocation2 + $0x8] sm:$0xff]
    %v220 = vld [vmem:[#allocation2 + $0x10] sm:$0xff]
    %v221 = vld [vmem:[#allocation2 + $0x18] sm:$0xff]
    %v222 = vld [vmem:[#allocation2 + $0x20] sm:$0xff]
    %v223 = vld [vmem:[#allocation2 + $0x28] sm:$0xff]
    %v224 = vld [vmem:[#allocation2 + $0x30] sm:$0xff]
    %v225 = vld [vmem:[#allocation2 + $0x38] sm:$0xff]
    %v226 = vld [vmem:[#allocation2 + $0x40] sm:$0xff]
    %v227 = vld [vmem:[#allocation2 + $0x48] sm:$0xff]
    %v228 = vld [vmem:[#allocation2 + $0x50] sm:$0xff]
    %v229 = vld [vmem:[#allocation2 + $0x58] sm:$0xff]
    %v230 = vld [vmem:[#allocation2 + $0x60] sm:$0xff]
    %v231 = vld [vmem:[#allocation2 + $0x68] sm:$0xff]
    %v232 = vld [vmem:[#allocation2 + $0x70] sm:$0xff]
    %v233 = vld [vmem:[#allocation2 + $0x78] sm:$0xff]
    %v234 = vld [vmem:[%s4] sm:$0x1]
    %v236 = vlaneseq
    %v237 = vshrl.u32 %v236, 7
    %v238 = vsub.s32 0, %v237
    %v239 = vrot.slane %v234, %v238
    %241 = vmatprep.subr.mxu0 0.0
    %242 = vmatpush1.msra.mxu0 %v233
    %243 = vmatprep.subr.mxu0 0.0
    %244 = vmatpush1.msra.mxu0 %v232
    %245 = vmatprep.subr.mxu0 0.0
    %246 = vmatpush1.msra.mxu0 %v231
    %247 = vmatprep.subr.mxu0 0.0
    %248 = vmatpush1.msra.mxu0 %v230
    %249 = vmatprep.subr.mxu0 0.0
    %250 = vmatpush1.msra.mxu0 %v229
    %251 = vmatprep.subr.mxu0 0.0
    %252 = vmatpush1.msra.mxu0 %v228
    %253 = vmatprep.subr.mxu0 0.0
    %254 = vmatpush1.msra.mxu0 %v227
    %255 = vmatprep.subr.mxu0 0.0
    %256 = vmatpush1.msra.mxu0 %v226
    %257 = vmatprep.subr.mxu0 0.0
    %258 = vmatpush1.msra.mxu0 %v225
    %259 = vmatprep.subr.mxu0 0.0
    %260 = vmatpush1.msra.mxu0 %v224
    %261 = vmatprep.subr.mxu0 0.0
    %262 = vmatpush1.msra.mxu0 %v223
    %263 = vmatprep.subr.mxu0 0.0
    %264 = vmatpush1.msra.mxu0 %v222
    %265 = vmatprep.subr.mxu0 0.0
    %266 = vmatpush1.msra.mxu0 %v221
    %267 = vmatprep.subr.mxu0 0.0
    %268 = vmatpush1.msra.mxu0 %v220
    %269 = vmatprep.subr.mxu0 0.0
    %270 = vmatpush1.msra.mxu0 %v219
    %271 = vmatprep.subr.mxu0 0.0
    %272 = vmatpush1.msra.mxu0 %v218
    %273 = vmatprep.subr.mxu0 0.0
    %274 = vmatpush2.msra.mxu0 0.0
    %275 = vmatprep.subr.mxu0 0.0
    %276 = vmatpush2.msra.mxu0 0.0
    %277 = vmatprep.subr.mxu0 0.0
    %278 = vmatpush2.msra.mxu0 0.0
    %279 = vmatprep.subr.mxu0 0.0
    %280 = vmatpush2.msra.mxu0 0.0
    %281 = vmatprep.subr.mxu0 0.0
    %282 = vmatpush2.msra.mxu0 0.0
    %283 = vmatprep.subr.mxu0 0.0
    %284 = vmatpush2.msra.mxu0 0.0
    %285 = vmatprep.subr.mxu0 0.0
    %286 = vmatpush2.msra.mxu0 0.0
    %287 = vmatprep.subr.mxu0 0.0
    %288 = vmatpush2.msra.mxu0 0.0
    %289 = vmatprep.subr.mxu0 0.0
    %290 = vmatpush2.msra.mxu0 0.0
    %291 = vmatprep.subr.mxu0 0.0
    %292 = vmatpush2.msra.mxu0 0.0
    %293 = vmatprep.subr.mxu0 0.0
    %294 = vmatpush2.msra.mxu0 0.0
    %295 = vmatprep.subr.mxu0 0.0
    %296 = vmatpush2.msra.mxu0 0.0
    %297 = vmatprep.subr.mxu0 0.0
    %298 = vmatpush2.msra.mxu0 0.0
    %299 = vmatprep.subr.mxu0 0.0
    %300 = vmatpush2.msra.mxu0 0.0
    %301 = vmatprep.subr.mxu0 0.0
    %302 = vmatpush2.msra.mxu0 0.0
    %303 = vmatprep.subr.mxu0 0.0
    %304 = vmatpush2.msra.mxu0 0.0
    %305 = vmatprep.mubr.f32.mxu0 0.0
    %306 = vmatmul.mubr.f32.gmra.mxu0 %v210
    %v307 = vpop.f32.mrf.mxu0
    %v308 = vadd.f32 %v239, %v307
    %v309 = vpop.f32.mrf.mxu0
    %310 = vmatprep.mubr.f32.mxu0 0.0
    %311 = vmatmul.mubr.f32.gmra.mxu0 %v211
    %v312 = vpop.f32.mrf.mxu0
    %v313 = vadd.f32 %v239, %v312
    %v314 = vpop.f32.mrf.mxu0
    %315 = vmatprep.mubr.f32.mxu0 0.0
    %316 = vmatmul.mubr.f32.gmra.mxu0 %v212
    %v317 = vpop.f32.mrf.mxu0
    %v318 = vadd.f32 %v239, %v317
    %v319 = vpop.f32.mrf.mxu0
    %320 = vmatprep.mubr.f32.mxu0 0.0
    %321 = vmatmul.mubr.f32.gmra.mxu0 %v213
    %v322 = vpop.f32.mrf.mxu0
    %v323 = vadd.f32 %v239, %v322
    %v324 = vpop.f32.mrf.mxu0
    %325 = vmatprep.mubr.f32.mxu0 0.0
    %326 = vmatmul.mubr.f32.gmra.mxu0 %v214
    %v327 = vpop.f32.mrf.mxu0
    %v328 = vadd.f32 %v239, %v327
    %v329 = vpop.f32.mrf.mxu0
    %330 = vmatprep.mubr.f32.mxu0 0.0
    %331 = vmatmul.mubr.f32.gmra.mxu0 %v215
    %v332 = vpop.f32.mrf.mxu0
    %v333 = vadd.f32 %v239, %v332
    %v334 = vpop.f32.mrf.mxu0
    %335 = vmatprep.mubr.f32.mxu0 0.0
    %336 = vmatmul.mubr.f32.gmra.mxu0 %v216
    %v337 = vpop.f32.mrf.mxu0
    %v338 = vadd.f32 %v239, %v337
    %v339 = vpop.f32.mrf.mxu0
    %340 = vmatprep.mubr.f32.mxu0 0.0
    %341 = vmatmul.mubr.f32.gmra.mxu0 %v217
    %v342 = vpop.f32.mrf.mxu0
    %v343 = vadd.f32 %v239, %v342
    %v344 = vpop.f32.mrf.mxu0
    %345 = vdwg.mxu0
    %v346 = vmax.f32 %v308, 0.0
    %v347 = vmax.f32 %v313, 0.0
    %v348 = vmax.f32 %v318, 0.0
    %v349 = vmax.f32 %v323, 0.0
    %v350 = vmax.f32 %v328, 0.0
    %v351 = vmax.f32 %v333, 0.0
    %v352 = vmax.f32 %v338, 0.0
    %v353 = vmax.f32 %v343, 0.0
    %v354 = vld [vmem:[#allocation4] sm:$0xff]
    %v355 = vld [vmem:[#allocation4 + $0x8] sm:$0xff]
    %v356 = vld [vmem:[#allocation4 + $0x10] sm:$0xff]
    %v357 = vld [vmem:[#allocation4 + $0x18] sm:$0xff]
    %v358 = vld [vmem:[#allocation4 + $0x20] sm:$0xff]
    %v359 = vld [vmem:[#allocation4 + $0x28] sm:$0xff]
    %v360 = vld [vmem:[#allocation4 + $0x30] sm:$0xff]
    %v361 = vld [vmem:[#allocation4 + $0x38] sm:$0xff]
    %v362 = vld [vmem:[#allocation4 + $0x40] sm:$0xff]
    %v363 = vld [vmem:[#allocation4 + $0x48] sm:$0xff]
    %v364 = vld [vmem:[#allocation4 + $0x50] sm:$0xff]
    %v365 = vld [vmem:[#allocation4 + $0x58] sm:$0xff]
    %v366 = vld [vmem:[#allocation4 + $0x60] sm:$0xff]
    %v367 = vld [vmem:[#allocation4 + $0x68] sm:$0xff]
    %v368 = vld [vmem:[#allocation4 + $0x70] sm:$0xff]
    %v369 = vld [vmem:[#allocation4 + $0x78] sm:$0xff]
    %v370 = vld [vmem:[%s6] sm:$0x1]
    %v372 = vlaneseq
    %v373 = vshrl.u32 %v372, 7
    %v374 = vsub.s32 0, %v373
    %v375 = vrot.slane %v370, %v374
    %377 = vmatprep.subr.mxu0 0.0
    %378 = vmatpush1.msra.mxu0 %v369
    %379 = vmatprep.subr.mxu0 0.0
    %380 = vmatpush1.msra.mxu0 %v368
    %381 = vmatprep.subr.mxu0 0.0
    %382 = vmatpush1.msra.mxu0 %v367
    %383 = vmatprep.subr.mxu0 0.0
    %384 = vmatpush1.msra.mxu0 %v366
    %385 = vmatprep.subr.mxu0 0.0
    %386 = vmatpush1.msra.mxu0 %v365
    %387 = vmatprep.subr.mxu0 0.0
    %388 = vmatpush1.msra.mxu0 %v364
    %389 = vmatprep.subr.mxu0 0.0
    %390 = vmatpush1.msra.mxu0 %v363
    %391 = vmatprep.subr.mxu0 0.0
    %392 = vmatpush1.msra.mxu0 %v362
    %393 = vmatprep.subr.mxu0 0.0
    %394 = vmatpush1.msra.mxu0 %v361
    %395 = vmatprep.subr.mxu0 0.0
    %396 = vmatpush1.msra.mxu0 %v360
    %397 = vmatprep.subr.mxu0 0.0
    %398 = vmatpush1.msra.mxu0 %v359
    %399 = vmatprep.subr.mxu0 0.0
    %400 = vmatpush1.msra.mxu0 %v358
    %401 = vmatprep.subr.mxu0 0.0
    %402 = vmatpush1.msra.mxu0 %v357
    %403 = vmatprep.subr.mxu0 0.0
    %404 = vmatpush1.msra.mxu0 %v356
    %405 = vmatprep.subr.mxu0 0.0
    %406 = vmatpush1.msra.mxu0 %v355
    %407 = vmatprep.subr.mxu0 0.0
    %408 = vmatpush1.msra.mxu0 %v354
    %409 = vmatprep.subr.mxu0 0.0
    %410 = vmatpush2.msra.mxu0 0.0
    %411 = vmatprep.subr.mxu0 0.0
    %412 = vmatpush2.msra.mxu0 0.0
    %413 = vmatprep.subr.mxu0 0.0
    %414 = vmatpush2.msra.mxu0 0.0
    %415 = vmatprep.subr.mxu0 0.0
    %416 = vmatpush2.msra.mxu0 0.0
    %417 = vmatprep.subr.mxu0 0.0
    %418 = vmatpush2.msra.mxu0 0.0
    %419 = vmatprep.subr.mxu0 0.0
    %420 = vmatpush2.msra.mxu0 0.0
    %421 = vmatprep.subr.mxu0 0.0
    %422 = vmatpush2.msra.mxu0 0.0
    %423 = vmatprep.subr.mxu0 0.0
    %424 = vmatpush2.msra.mxu0 0.0
    %425 = vmatprep.subr.mxu0 0.0
    %426 = vmatpush2.msra.mxu0 0.0
    %427 = vmatprep.subr.mxu0 0.0
    %428 = vmatpush2.msra.mxu0 0.0
    %429 = vmatprep.subr.mxu0 0.0
    %430 = vmatpush2.msra.mxu0 0.0
    %431 = vmatprep.subr.mxu0 0.0
    %432 = vmatpush2.msra.mxu0 0.0
    %433 = vmatprep.subr.mxu0 0.0
    %434 = vmatpush2.msra.mxu0 0.0
    %435 = vmatprep.subr.mxu0 0.0
    %436 = vmatpush2.msra.mxu0 0.0
    %437 = vmatprep.subr.mxu0 0.0
    %438 = vmatpush2.msra.mxu0 0.0
    %439 = vmatprep.subr.mxu0 0.0
    %440 = vmatpush2.msra.mxu0 0.0
    %441 = vmatprep.mubr.f32.mxu0 0.0
    %442 = vmatmul.mubr.f32.gmra.mxu0 %v346
    %v443 = vpop.f32.mrf.mxu0
    %v444 = vadd.f32 %v375, %v443
    %v445 = vpop.f32.mrf.mxu0
    %446 = vmatprep.mubr.f32.mxu0 0.0
    %447 = vmatmul.mubr.f32.gmra.mxu0 %v347
    %v448 = vpop.f32.mrf.mxu0
    %v449 = vadd.f32 %v375, %v448
    %v450 = vpop.f32.mrf.mxu0
    %451 = vmatprep.mubr.f32.mxu0 0.0
    %452 = vmatmul.mubr.f32.gmra.mxu0 %v348
    %v453 = vpop.f32.mrf.mxu0
    %v454 = vadd.f32 %v375, %v453
    %v455 = vpop.f32.mrf.mxu0
    %456 = vmatprep.mubr.f32.mxu0 0.0
    %457 = vmatmul.mubr.f32.gmra.mxu0 %v349
    %v458 = vpop.f32.mrf.mxu0
    %v459 = vadd.f32 %v375, %v458
    %v460 = vpop.f32.mrf.mxu0
    %461 = vmatprep.mubr.f32.mxu0 0.0
    %462 = vmatmul.mubr.f32.gmra.mxu0 %v350
    %v463 = vpop.f32.mrf.mxu0
    %v464 = vadd.f32 %v375, %v463
    %v465 = vpop.f32.mrf.mxu0
    %466 = vmatprep.mubr.f32.mxu0 0.0
    %467 = vmatmul.mubr.f32.gmra.mxu0 %v351
    %v468 = vpop.f32.mrf.mxu0
    %v469 = vadd.f32 %v375, %v468
    %v470 = vpop.f32.mrf.mxu0
    %471 = vmatprep.mubr.f32.mxu0 0.0
    %472 = vmatmul.mubr.f32.gmra.mxu0 %v352
    %v473 = vpop.f32.mrf.mxu0
    %v474 = vadd.f32 %v375, %v473
    %v475 = vpop.f32.mrf.mxu0
    %476 = vmatprep.mubr.f32.mxu0 0.0
    %477 = vmatmul.mubr.f32.gmra.mxu0 %v353
    %v478 = vpop.f32.mrf.mxu0
    %v479 = vadd.f32 %v375, %v478
    %v480 = vpop.f32.mrf.mxu0
    %481 = vdwg.mxu0
    %v482 = vmax.f32 %v444, 0.0
    %v483 = vmax.f32 %v449, 0.0
    %v484 = vmax.f32 %v454, 0.0
    %v485 = vmax.f32 %v459, 0.0
    %v486 = vmax.f32 %v464, 0.0
    %v487 = vmax.f32 %v469, 0.0
    %v488 = vmax.f32 %v474, 0.0
    %v489 = vmax.f32 %v479, 0.0
    %v490 = vld [vmem:[#allocation6] sm:$0xff]
    %v491 = vld [vmem:[#allocation6 + $0x8] sm:$0xff]
    %v492 = vld [vmem:[#allocation6 + $0x10] sm:$0xff]
    %v493 = vld [vmem:[#allocation6 + $0x18] sm:$0xff]
    %v494 = vld [vmem:[#allocation6 + $0x20] sm:$0xff]
    %v495 = vld [vmem:[#allocation6 + $0x28] sm:$0xff]
    %v496 = vld [vmem:[#allocation6 + $0x30] sm:$0xff]
    %v497 = vld [vmem:[#allocation6 + $0x38] sm:$0xff]
    %v498 = vld [vmem:[#allocation6 + $0x40] sm:$0xff]
    %v499 = vld [vmem:[#allocation6 + $0x48] sm:$0xff]
    %v500 = vld [vmem:[#allocation6 + $0x50] sm:$0xff]
    %v501 = vld [vmem:[#allocation6 + $0x58] sm:$0xff]
    %v502 = vld [vmem:[#allocation6 + $0x60] sm:$0xff]
    %v503 = vld [vmem:[#allocation6 + $0x68] sm:$0xff]
    %v504 = vld [vmem:[#allocation6 + $0x70] sm:$0xff]
    %v505 = vld [vmem:[#allocation6 + $0x78] sm:$0xff]
    %v506 = vld [vmem:[%s8] sm:$0x1]
    %v508 = vlaneseq
    %v509 = vshrl.u32 %v508, 7
    %v510 = vsub.s32 0, %v509
    %v511 = vrot.slane %v506, %v510
    %513 = vmatprep.subr.mxu0 0.0
    %514 = vmatpush1.msra.mxu0 %v505
    %515 = vmatprep.subr.mxu0 0.0
    %516 = vmatpush1.msra.mxu0 %v504
    %517 = vmatprep.subr.mxu0 0.0
    %518 = vmatpush1.msra.mxu0 %v503
    %519 = vmatprep.subr.mxu0 0.0
    %520 = vmatpush1.msra.mxu0 %v502
    %521 = vmatprep.subr.mxu0 0.0
    %522 = vmatpush1.msra.mxu0 %v501
    %523 = vmatprep.subr.mxu0 0.0
    %524 = vmatpush1.msra.mxu0 %v500
    %525 = vmatprep.subr.mxu0 0.0
    %526 = vmatpush1.msra.mxu0 %v499
    %527 = vmatprep.subr.mxu0 0.0
    %528 = vmatpush1.msra.mxu0 %v498
    %529 = vmatprep.subr.mxu0 0.0
    %530 = vmatpush1.msra.mxu0 %v497
    %531 = vmatprep.subr.mxu0 0.0
    %532 = vmatpush1.msra.mxu0 %v496
    %533 = vmatprep.subr.mxu0 0.0
    %534 = vmatpush1.msra.mxu0 %v495
    %535 = vmatprep.subr.mxu0 0.0
    %536 = vmatpush1.msra.mxu0 %v494
    %537 = vmatprep.subr.mxu0 0.0
    %538 = vmatpush1.msra.mxu0 %v493
    %539 = vmatprep.subr.mxu0 0.0
    %540 = vmatpush1.msra.mxu0 %v492
    %541 = vmatprep.subr.mxu0 0.0
    %542 = vmatpush1.msra.mxu0 %v491
    %543 = vmatprep.subr.mxu0 0.0
    %544 = vmatpush1.msra.mxu0 %v490
    %545 = vmatprep.subr.mxu0 0.0
    %546 = vmatpush2.msra.mxu0 0.0
    %547 = vmatprep.subr.mxu0 0.0
    %548 = vmatpush2.msra.mxu0 0.0
    %549 = vmatprep.subr.mxu0 0.0
    %550 = vmatpush2.msra.mxu0 0.0
    %551 = vmatprep.subr.mxu0 0.0
    %552 = vmatpush2.msra.mxu0 0.0
    %553 = vmatprep.subr.mxu0 0.0
    %554 = vmatpush2.msra.mxu0 0.0
    %555 = vmatprep.subr.mxu0 0.0
    %556 = vmatpush2.msra.mxu0 0.0
    %557 = vmatprep.subr.mxu0 0.0
    %558 = vmatpush2.msra.mxu0 0.0
    %559 = vmatprep.subr.mxu0 0.0
    %560 = vmatpush2.msra.mxu0 0.0
    %561 = vmatprep.subr.mxu0 0.0
    %562 = vmatpush2.msra.mxu0 0.0
    %563 = vmatprep.subr.mxu0 0.0
    %564 = vmatpush2.msra.mxu0 0.0
    %565 = vmatprep.subr.mxu0 0.0
    %566 = vmatpush2.msra.mxu0 0.0
    %567 = vmatprep.subr.mxu0 0.0
    %568 = vmatpush2.msra.mxu0 0.0
    %569 = vmatprep.subr.mxu0 0.0
    %570 = vmatpush2.msra.mxu0 0.0
    %571 = vmatprep.subr.mxu0 0.0
    %572 = vmatpush2.msra.mxu0 0.0
    %573 = vmatprep.subr.mxu0 0.0
    %574 = vmatpush2.msra.mxu0 0.0
    %575 = vmatprep.subr.mxu0 0.0
    %576 = vmatpush2.msra.mxu0 0.0
    %577 = vmatprep.mubr.f32.mxu0 0.0
    %578 = vmatmul.mubr.f32.gmra.mxu0 %v482
    %v579 = vpop.f32.mrf.mxu0
    %v580 = vadd.f32 %v511, %v579
    %v581 = vpop.f32.mrf.mxu0
    %582 = vmatprep.mubr.f32.mxu0 0.0
    %583 = vmatmul.mubr.f32.gmra.mxu0 %v483
    %v584 = vpop.f32.mrf.mxu0
    %v585 = vadd.f32 %v511, %v584
    %v586 = vpop.f32.mrf.mxu0
    %587 = vmatprep.mubr.f32.mxu0 0.0
    %588 = vmatmul.mubr.f32.gmra.mxu0 %v484
    %v589 = vpop.f32.mrf.mxu0
    %v590 = vadd.f32 %v511, %v589
    %v591 = vpop.f32.mrf.mxu0
    %592 = vmatprep.mubr.f32.mxu0 0.0
    %593 = vmatmul.mubr.f32.gmra.mxu0 %v485
    %v594 = vpop.f32.mrf.mxu0
    %v595 = vadd.f32 %v511, %v594
    %v596 = vpop.f32.mrf.mxu0
    %597 = vmatprep.mubr.f32.mxu0 0.0
    %598 = vmatmul.mubr.f32.gmra.mxu0 %v486
    %v599 = vpop.f32.mrf.mxu0
    %v600 = vadd.f32 %v511, %v599
    %v601 = vpop.f32.mrf.mxu0
    %602 = vmatprep.mubr.f32.mxu0 0.0
    %603 = vmatmul.mubr.f32.gmra.mxu0 %v487
    %v604 = vpop.f32.mrf.mxu0
    %v605 = vadd.f32 %v511, %v604
    %v606 = vpop.f32.mrf.mxu0
    %607 = vmatprep.mubr.f32.mxu0 0.0
    %608 = vmatmul.mubr.f32.gmra.mxu0 %v488
    %v609 = vpop.f32.mrf.mxu0
    %v610 = vadd.f32 %v511, %v609
    %v611 = vpop.f32.mrf.mxu0
    %612 = vmatprep.mubr.f32.mxu0 0.0
    %613 = vmatmul.mubr.f32.gmra.mxu0 %v489
    %v614 = vpop.f32.mrf.mxu0
    %v615 = vadd.f32 %v511, %v614
    %v616 = vpop.f32.mrf.mxu0
    %617 = vdwg.mxu0
    %618 = vst [vmem:[%s9] sm:$0xff] %v580
    %619 = vst [vmem:[%s9 + $0x8] sm:$0xff] %v585
    %620 = vst [vmem:[%s9 + $0x10] sm:$0xff] %v590
    %621 = vst [vmem:[%s9 + $0x18] sm:$0xff] %v595
    %622 = vst [vmem:[%s9 + $0x20] sm:$0xff] %v600
    %623 = vst [vmem:[%s9 + $0x28] sm:$0xff] %v605
    %624 = vst [vmem:[%s9 + $0x30] sm:$0xff] %v610
    %625 = vst [vmem:[%s9 + $0x38] sm:$0xff] %v615
    // Predicated region
    $region50: #{_lambda_.1} parent=1 // pred_check
      _
    $region51: #{_lambda_.1} parent=1 // pred_check_branch
      %627 = sbr.rel (0) target = $region53
    $region52: #{_lambda_.1} parent=1 // pred_region
      _
    $region53: #{_lambda_.1} parent=1 // pred_fallthru
      _
    // Predicated region
    $region54: #{_lambda_.1} parent=1 // pred_check
      _
    $region55: #{_lambda_.1} parent=1 // pred_check_branch
      %629 = sbr.rel (0) target = $region57
    $region56: #{_lambda_.1} parent=1 // pred_region
      _
    $region57: #{_lambda_.1} parent=1 // pred_fallthru
      _
    %630 = vsyncpa [#allocation3], 1
    %631 = vsyncpa [#allocation5], 1

</llo_original>
